<compile_context>
chip_gen: v7x
topology: tpu7x:2x2x1
jax: 0.10.0
libtpu: 0.0.40
codegen_flags: <defaults>
</compile_context>

<pallas_src>
import functools
import math
from typing import NamedTuple

import jax
import jax.numpy as jnp
from jax.experimental import pallas as pl
from jax.experimental.pallas import tpu as pltpu


_SUBLANE = 8
_MAX_ROW_TILE = 2048


class _HW(NamedTuple):
    on_tpu: bool
    two_tc: bool
    vmem_tile_budget: int
    vmem_limit_bytes: int
    min_grid_steps: int


@functools.lru_cache(maxsize=1)
def _hw_params() -> _HW:
    """Generation-aware tuning knobs; conservative defaults off-TPU / unknown."""
    kind = ""
    on_tpu = False
    try:
        on_tpu = jax.default_backend() == "tpu"
        if on_tpu:
            kind = jax.devices()[0].device_kind.lower()
    except Exception:
        on_tpu = False
    is_v7 = on_tpu and ("7" in kind)            # v7x: 2 TCs, 64 MiB VMEM per TC
    if (not on_tpu) or is_v7:
        budget, limit = 12 << 20, 32 << 20      # conservative (fits v7x scoped VMEM)
    else:
        budget, limit = 32 << 20, 64 << 20      # v5e/v6e: 128 MiB physical VMEM
    min_steps = 4 if is_v7 else 1               # only v7x benefits from >=4 grid steps
    return _HW(on_tpu, is_v7, budget, limit, min_steps)


def _row_multiple(itemsize):
    """Native sublane multiple for a dtype: f32->8, bf16->16, int8/fp8->32."""
    return max(_SUBLANE, 32 // int(itemsize))


def _choose_row_tile(rows, size, stream_itemsizes, hw, *, extra_bytes=0):
    """Largest row tile whose double-buffered streams (+ f32 temporaries) fit VMEM."""
    budget = max(1, hw.vmem_tile_budget - int(extra_bytes))
    # double-buffered DMA blocks for every streamed array + ~4 f32 temporaries/row
    per_row = 2 * size * sum(stream_itemsizes) + 4 * size * 4
    sub = _row_multiple(min(stream_itemsizes))
    max_rows = max(sub, budget // per_row)
    tile = min(rows, max_rows, _MAX_ROW_TILE)
    # Keep >= min_grid_steps grid steps (megacore sharding on v7x only).
    tile = min(tile, max(sub, (rows + hw.min_grid_steps - 1) // hw.min_grid_steps))
    return max(sub, (int(tile) // sub) * sub)


def _dropout_consts(dropout_rate, training):
    keep_prob = 1.0 - float(dropout_rate)
    apply_dropout = bool(training) and keep_prob < 1.0
    if keep_prob <= 0.0:
        return apply_dropout, 0, 0.0
    keep_threshold = min(int(round(keep_prob * (1 << 32))), (1 << 32) - 1)
    return apply_dropout, keep_threshold, 1.0 / keep_prob


# ------------------------------- kernel bodies -------------------------------

def _maybe_dropout(nx, bits_ref, keep_threshold, inv_keep_prob, has_dropout):
    if not has_dropout:
        return nx
    keep = bits_ref[...] < jnp.uint32(keep_threshold)
    return jnp.where(keep, nx * jnp.float32(inv_keep_prob), jnp.float32(0.0))


def _residual_ln_body(x, nx, gamma, beta, eps):
    """f32 -> f32: LayerNorm(x + nx) over the last axis (centered two-pass var)."""
    y = x + nx
    mean = jnp.mean(y, axis=-1, keepdims=True)
    centered = y - mean
    var = jnp.mean(centered * centered, axis=-1, keepdims=True)
    inv = jax.lax.rsqrt(var + jnp.float32(eps))
    return centered * inv * gamma + beta


def _residual_ln_kernel(*refs, eps, keep_threshold, inv_keep_prob, has_dropout):
    if has_dropout:
        x_ref, nx_ref, bits_ref, gamma_ref, beta_ref, out_ref = refs
    else:
        x_ref, nx_ref, gamma_ref, beta_ref, out_ref = refs
        bits_ref = None
    x = x_ref[...].astype(jnp.float32)                       # (TR, size)
    nx = nx_ref[...].astype(jnp.float32)                     # (TR, size)
    nx = _maybe_dropout(nx, bits_ref, keep_threshold, inv_keep_prob, has_dropout)
    out = _residual_ln_body(x, nx,
                            gamma_ref[...].astype(jnp.float32),
                            beta_ref[...].astype(jnp.float32), eps)
    out_ref[...] = out.astype(out_ref.dtype)


def _fused_proj_residual_ln_kernel(*refs, eps, keep_threshold, inv_keep_prob,
                                   has_dropout, matmul_dtype):
    # Producer fused: new_x = tanh(x @ W) computed on the MXU; never hits HBM.
    if has_dropout:
        x_ref, w_ref, bits_ref, gamma_ref, beta_ref, out_ref = refs
    else:
        x_ref, w_ref, gamma_ref, beta_ref, out_ref = refs
        bits_ref = None
    xin = x_ref[...]
    x_mxu = xin.astype(matmul_dtype) if matmul_dtype is not None else xin
    # bf16 operands feed the MXU at native rate; accumulate in f32.
    nx = jnp.tanh(jnp.dot(x_mxu, w_ref[...], preferred_element_type=jnp.float32))
    nx = _maybe_dropout(nx, bits_ref, keep_threshold, inv_keep_prob, has_dropout)
    x = xin.astype(jnp.float32)
    out = _residual_ln_body(x, nx,
                            gamma_ref[...].astype(jnp.float32),
                            beta_ref[...].astype(jnp.float32), eps)
    out_ref[...] = out.astype(out_ref.dtype)


# --------------------------------- wrappers ----------------------------------

def residual_dropout_layernorm(x, new_x, gamma, beta, *, dropout_rate=0.1,
                               eps=1e-6, training=False, seed=0, row_tile=None,
                               donate_new_x=True):
    """LayerNorm(x + dropout(new_x)) over the last axis, as one Pallas kernel."""
    orig_shape = x.shape
    size = int(orig_shape[-1])
    rows = int(math.prod(orig_shape[:-1]))
    out_dtype = x.dtype

    x2 = x.reshape(rows, size)
    nx2 = new_x.reshape(rows, size)
    gamma2 = jnp.asarray(gamma, jnp.float32).reshape(1, size)
    beta2 = jnp.asarray(beta, jnp.float32).reshape(1, size)

    apply_dropout, keep_threshold, inv_keep_prob = _dropout_consts(dropout_rate, training)
    hw = _hw_params()

    stream_itemsizes = [jnp.dtype(x2.dtype).itemsize,
                        jnp.dtype(nx2.dtype).itemsize,
                        jnp.dtype(out_dtype).itemsize]
    if apply_dropout:
        stream_itemsizes.append(4)                       # uint32 random bits
    if row_tile is None:
        row_tile = _choose_row_tile(rows, size, stream_itemsizes, hw)
    sub = _row_multiple(min(stream_itemsizes))
    row_tile = max(sub, (int(row_tile) // sub) * sub)
    n_tiles = (rows + row_tile - 1) // row_tile          # partial last block is clipped

    kernel = functools.partial(
        _residual_ln_kernel, eps=float(eps), keep_threshold=keep_threshold,
        inv_keep_prob=inv_keep_prob, has_dropout=apply_dropout)

    row_spec = pl.BlockSpec((row_tile, size), lambda i: (i, 0))
    vec_spec = pl.BlockSpec((1, size), lambda i: (0, 0))   # grid-invariant

    inputs = [x2, nx2]
    in_specs = [row_spec, row_spec]
    if apply_dropout:
        bits = jax.random.bits(jax.random.PRNGKey(int(seed)), (rows, size),
                               dtype=jnp.uint32)
        inputs.append(bits)
        in_specs.append(row_spec)
    inputs += [gamma2, beta2]
    in_specs += [vec_spec, vec_spec]

    # new_x is dead after this op: donate its HBM buffer to the output.
    aliases = {}
    if donate_new_x and nx2.dtype == out_dtype:
        aliases = {1: 0}

    out2 = pl.pallas_call(
        kernel,
        out_shape=jax.ShapeDtypeStruct((rows, size), out_dtype),
        grid=(n_tiles,),
        in_specs=in_specs,
        out_specs=row_spec,
        input_output_aliases=aliases,
        compiler_params=pltpu.CompilerParams(
            dimension_semantics=("parallel",),
            vmem_limit_bytes=hw.vmem_limit_bytes),
    )(*inputs)

    return out2.reshape(orig_shape)


def fused_proj_residual_dropout_layernorm(x, w, gamma, beta, *, dropout_rate=0.1,
                                          eps=1e-6, training=False, seed=0,
                                          row_tile=None, matmul_dtype=jnp.bfloat16):
    """LayerNorm(x + dropout(tanh(x @ w))): projection-style sublayer fused into
    the kernel so new_x never touches HBM.  The matmul runs on the MXU in
    `matmul_dtype` (bf16 by default; pass None to keep the native dtype)."""
    orig_shape = x.shape
    size = int(orig_shape[-1])
    rows = int(math.prod(orig_shape[:-1]))
    out_dtype = x.dtype

    x2 = x.reshape(rows, size)
    w2 = jnp.asarray(w).reshape(size, size)
    if matmul_dtype is not None:
        w2 = w2.astype(matmul_dtype)                     # halves W's DMA / VMEM (bf16)
    gamma2 = jnp.asarray(gamma, jnp.float32).reshape(1, size)
    beta2 = jnp.asarray(beta, jnp.float32).reshape(1, size)

    apply_dropout, keep_threshold, inv_keep_prob = _dropout_consts(dropout_rate, training)
    hw = _hw_params()

    w_buffers = 1 if hw.on_tpu else 2                    # single-buffered on TPU
    w_bytes = w_buffers * size * size * jnp.dtype(w2.dtype).itemsize
    stream_itemsizes = [jnp.dtype(x2.dtype).itemsize, jnp.dtype(out_dtype).itemsize]
    if apply_dropout:
        stream_itemsizes.append(4)
    if row_tile is None:
        row_tile = _choose_row_tile(rows, size, stream_itemsizes, hw,
                                    extra_bytes=w_bytes)
    sub = _row_multiple(min(stream_itemsizes))
    row_tile = max(sub, (int(row_tile) // sub) * sub)
    n_tiles = (rows + row_tile - 1) // row_tile

    kernel = functools.partial(
        _fused_proj_residual_ln_kernel, eps=float(eps),
        keep_threshold=keep_threshold, inv_keep_prob=inv_keep_prob,
        has_dropout=apply_dropout, matmul_dtype=matmul_dtype)

    row_spec = pl.BlockSpec((row_tile, size), lambda i: (i, 0))
    vec_spec = pl.BlockSpec((1, size), lambda i: (0, 0))
    if hw.on_tpu:
        # W is grid-invariant; single-buffer it so the freed VMEM goes to row tiles.
        w_spec = pl.BlockSpec((size, size), lambda i: (0, 0),
                              pipeline_mode=pl.Buffered(1))
    else:
        w_spec = pl.BlockSpec((size, size), lambda i: (0, 0))

    inputs = [x2, w2]
    in_specs = [row_spec, w_spec]
    if apply_dropout:
        bits = jax.random.bits(jax.random.PRNGKey(int(seed)), (rows, size),
                               dtype=jnp.uint32)
        inputs.append(bits)
        in_specs.append(row_spec)
    inputs += [gamma2, beta2]
    in_specs += [vec_spec, vec_spec]

    out2 = pl.pallas_call(
        kernel,
        out_shape=jax.ShapeDtypeStruct((rows, size), out_dtype),
        grid=(n_tiles,),
        in_specs=in_specs,
        out_specs=row_spec,
        compiler_params=pltpu.CompilerParams(
            dimension_semantics=("parallel",),
            vmem_limit_bytes=hw.vmem_limit_bytes),
    )(*inputs)

    return out2.reshape(orig_shape)


def sublayer_polar_connection(x, radius, phase, old_position_e, sublayer_fn,
                              gamma, beta, *, dropout_rate=0.1, eps=1e-6,
                              training=False, seed=0, row_tile=None):
    """JAX wrapper reproducing SublayerPolarConnection.forward for an arbitrary
    sublayer callable (sublayer runs in plain JAX; the residual+dropout+LayerNorm
    hot path runs as a single Pallas kernel)."""
    new_x, radius_new, phase_new, position_e = sublayer_fn(
        x, radius, phase, old_position_e)
    new_x_out = residual_dropout_layernorm(
        x, new_x, gamma, beta, dropout_rate=dropout_rate, eps=eps,
        training=training, seed=seed, row_tile=row_tile)
    return new_x_out, radius_new, phase_new, position_e


if __name__ == "__main__":
    # Small shapes: batch=2, seq=8, size=32 (LayerNorm feature dim).
    B, S, size = 2, 8, 32
    key = jax.random.PRNGKey(0)
    kx, kr, kp, kpos, kw = jax.random.split(key, 5)

    x = jax.random.normal(kx, (B, S, size), dtype=jnp.float32)
    radius = jax.random.normal(kr, (B, S, size), dtype=jnp.float32)
    phase = jax.random.normal(kp, (B, S, size), dtype=jnp.float32)
    old_position_e = jax.random.normal(kpos, (B, S, size), dtype=jnp.float32)

    # LayerNorm params (a_2 = ones, b_2 = zeros as at init).
    gamma = jnp.ones((size,), dtype=jnp.float32)
    beta = jnp.zeros((size,), dtype=jnp.float32)

    # Deterministic synthetic sublayer (the reference takes an arbitrary callable).
    W = (jax.random.normal(kw, (size, size), dtype=jnp.float32) /
         jnp.sqrt(jnp.float32(size)))

    def sublayer_fn(x, radius, phase, pos):
        return jnp.tanh(x @ W), radius * 0.5 + 1.0, phase + 0.1, pos

    def ref_ln_residual(xx, nx):
        y = xx + nx
        mean = jnp.mean(y, axis=-1, keepdims=True)
        var = jnp.mean((y - mean) ** 2, axis=-1, keepdims=True)
        return (y - mean) * jax.lax.rsqrt(var + 1e-6) * gamma + beta

    ref = ref_ln_residual(x, jnp.tanh(x @ W))

    # 1) Generic path (arbitrary sublayer callable), eval mode.
    new_x, radius_new, phase_new, position_e = sublayer_polar_connection(
        x, radius, phase, old_position_e, sublayer_fn, gamma, beta,
        dropout_rate=0.1, training=False, seed=0)
    jax.block_until_ready((new_x, radius_new, phase_new, position_e))
    assert new_x.dtype == x.dtype
    assert jnp.allclose(new_x, ref, atol=1e-4, rtol=1e-4)

    # 1b) Ragged rows (rows % row_tile != 0): pad-free partial-block path.
    x_r = jax.random.normal(kx, (2, 9, size), dtype=jnp.float32)
    nx_r = jnp.tanh(x_r @ W)
    ref_r = ref_ln_residual(x_r, nx_r)          # computed before nx_r is donated
    out_r = residual_dropout_layernorm(x_r, nx_r, gamma, beta,
                                       training=False, row_tile=8)
    jax.block_until_ready(out_r)
    assert jnp.allclose(out_r, ref_r, atol=1e-4, rtol=1e-4)

    # 2) Fused projection path: bf16 MXU matmul (f32 accumulation) — loosened tol.
    fused = fused_proj_residual_dropout_layernorm(
        x, W, gamma, beta, dropout_rate=0.1, training=False, seed=0)
    jax.block_until_ready(fused)
    assert fused.dtype == x.dtype
    assert jnp.allclose(fused, ref, atol=3e-2, rtol=3e-2)

    # 2b) Fused path with native-precision matmul — tight tolerance.
    fused_f32 = fused_proj_residual_dropout_layernorm(
        x, W, gamma, beta, training=False, matmul_dtype=None)
    jax.block_until_ready(fused_f32)
    assert jnp.allclose(fused_f32, ref, atol=1e-4, rtol=1e-4)

    # 3) Training mode exercises the streamed-bits dropout path.
    train_out, *_ = sublayer_polar_connection(
        x, radius, phase, old_position_e, sublayer_fn, gamma, beta,
        dropout_rate=0.1, training=True, seed=123)
    jax.block_until_ready(train_out)
    assert train_out.shape == x.shape
    assert bool(jnp.all(jnp.isfinite(train_out)))

    print("KERNEL_OK")
</pallas_src>

<mosaic_0001>
module attributes {stable_mosaic.version = 11 : i64} {
  func.func @_residual_ln_kernel(%arg0: i32, %arg1: memref<16x32xf32, #tpu.memory_space<vmem>>, %arg2: memref<16x32xf32, #tpu.memory_space<vmem>>, %arg3: memref<1x32xf32, #tpu.memory_space<vmem>>, %arg4: memref<1x32xf32, #tpu.memory_space<vmem>>, %arg5: memref<16x32xf32, #tpu.memory_space<vmem>>) attributes {dimension_semantics = [#tpu.dimension_semantics<parallel>], iteration_bounds = array<i64: 1>, scalar_prefetch = 0 : i64, scratch_operands = 0 : i64, tpu.core_type = #tpu.core_type<tc>, window_params = [{transform_indices = @transform_0, window_bounds = array<i64: 16, 32>}, {transform_indices = @transform_1, window_bounds = array<i64: 16, 32>}, {pipeline_mode = #tpu.pipeline_mode<synchronous>, transform_indices = @transform_2, window_bounds = array<i64: 1, 32>}, {pipeline_mode = #tpu.pipeline_mode<synchronous>, transform_indices = @transform_3, window_bounds = array<i64: 1, 32>}, {transform_indices = @transform_4, window_bounds = array<i64: 16, 32>}]} {
    %c0 = arith.constant 0 : index
    %c0_0 = arith.constant 0 : index
    %0 = vector.load %arg1[%c0, %c0_0] : memref<16x32xf32, #tpu.memory_space<vmem>>, vector<16x32xf32>
    %c0_1 = arith.constant 0 : index
    %c0_2 = arith.constant 0 : index
    %1 = vector.load %arg2[%c0_1, %c0_2] : memref<16x32xf32, #tpu.memory_space<vmem>>, vector<16x32xf32>
    %c0_3 = arith.constant 0 : index
    %c0_4 = arith.constant 0 : index
    %2 = vector.load %arg3[%c0_3, %c0_4] : memref<1x32xf32, #tpu.memory_space<vmem>>, vector<1x32xf32>
    %c0_5 = arith.constant 0 : index
    %c0_6 = arith.constant 0 : index
    %3 = vector.load %arg4[%c0_5, %c0_6] : memref<1x32xf32, #tpu.memory_space<vmem>>, vector<1x32xf32>
    %4 = arith.addf %0, %1 : vector<16x32xf32>
    %cst = arith.constant dense<0.000000e+00> : vector<16xf32>
    %5 = vector.multi_reduction <add>, %4, %cst [1] : vector<16x32xf32> to vector<16xf32>
    %6 = vector.shape_cast %5 : vector<16xf32> to vector<16x1xf32>
    %cst_7 = arith.constant 3.200000e+01 : f32
    %7 = vector.broadcast %cst_7 : f32 to vector<16x1xf32>
    %8 = arith.divf %6, %7 : vector<16x1xf32>
    %9 = vector.broadcast %8 : vector<16x1xf32> to vector<16x32xf32>
    %10 = arith.subf %4, %9 : vector<16x32xf32>
    %11 = arith.mulf %10, %10 : vector<16x32xf32>
    %cst_8 = arith.constant dense<0.000000e+00> : vector<16xf32>
    %12 = vector.multi_reduction <add>, %11, %cst_8 [1] : vector<16x32xf32> to vector<16xf32>
    %13 = vector.shape_cast %12 : vector<16xf32> to vector<16x1xf32>
    %cst_9 = arith.constant 3.200000e+01 : f32
    %14 = vector.broadcast %cst_9 : f32 to vector<16x1xf32>
    %15 = arith.divf %13, %14 : vector<16x1xf32>
    %cst_10 = arith.constant 9.99999997E-7 : f32
    %16 = vector.broadcast %cst_10 : f32 to vector<16x1xf32>
    %17 = arith.addf %15, %16 : vector<16x1xf32>
    %18 = math.rsqrt %17 : vector<16x1xf32>
    %19 = vector.broadcast %18 : vector<16x1xf32> to vector<16x32xf32>
    %20 = arith.mulf %10, %19 : vector<16x32xf32>
    %21 = vector.broadcast %2 : vector<1x32xf32> to vector<16x32xf32>
    %22 = arith.mulf %20, %21 : vector<16x32xf32>
    %23 = vector.broadcast %3 : vector<1x32xf32> to vector<16x32xf32>
    %24 = arith.addf %22, %23 : vector<16x32xf32>
    %c0_11 = arith.constant 0 : index
    %c0_12 = arith.constant 0 : index
    %25 = vector.load %arg5[%c0_11, %c0_12] : memref<16x32xf32, #tpu.memory_space<vmem>>, vector<16x32xf32>
    tpu.vector_store %arg5[%c0_11, %c0_12], %24 {strides = array<i32>} : memref<16x32xf32, #tpu.memory_space<vmem>>, vector<16x32xf32>,
    return
  }
  func.func @transform_0(%arg0: i32) -> (i32, i32) {
    %c0_i32 = arith.constant 0 : i32
    %c0_i32_0 = arith.constant 0 : i32
    return %arg0, %c0_i32 : i32, i32
  }
  func.func @transform_1(%arg0: i32) -> (i32, i32) {
    %c0_i32 = arith.constant 0 : i32
    %c0_i32_0 = arith.constant 0 : i32
    return %arg0, %c0_i32 : i32, i32
  }
  func.func @transform_2(%arg0: i32) -> (i32, i32) {
    %c0_i32 = arith.constant 0 : i32
    %c0_i32_0 = arith.constant 0 : i32
    %c0_i32_1 = arith.constant 0 : i32
    return %c0_i32, %c0_i32_0 : i32, i32
  }
  func.func @transform_3(%arg0: i32) -> (i32, i32) {
    %c0_i32 = arith.constant 0 : i32
    %c0_i32_0 = arith.constant 0 : i32
    %c0_i32_1 = arith.constant 0 : i32
    return %c0_i32, %c0_i32_0 : i32, i32
  }
  func.func @transform_4(%arg0: i32) -> (i32, i32) {
    %c0_i32 = arith.constant 0 : i32
    %c0_i32_0 = arith.constant 0 : i32
    return %arg0, %c0_i32 : i32, i32
  }
}

</mosaic_0001>

<llo_original>
// kernel: tpu_custom_call.1
$region0: #{tpu_custom_call.1}
  #allocation0 [shape = 'u32[]', space=smem, size = 0x4, offset = 0x4, fixed_abs, tag = 'smem constant byte address 0x4 - core index']
  #allocation1 [shape = 'u32[144,128]{1,0:T(1,128)}', space=vmem, size = 0x12000, scoped, tag = 'internal scratch']
  %s0 = inlined_call_operand.vmem [shape: f32[16,32], index: 0, kind: input, shape index: {}]
  %s1 = inlined_call_operand.hbm [shape: f32[16,32], index: 1, kind: input, shape index: {}, may-alias: {1,4}]
  %s2 = inlined_call_operand.vmem [shape: f32[1,32], index: 2, kind: input, shape index: {}]
  %s3 = inlined_call_operand.vmem [shape: f32[1,32], index: 3, kind: input, shape index: {}]
  %s4 = inlined_call_operand.hbm [shape: f32[16,32], index: 4, kind: output, shape index: {}, may-alias: {1,4}]
  %s5 = sld [smem:[#allocation0]]
  $region30: #{tpu_custom_call.1} parent=0
    _
  %s7 = ssub.s32 1, %s5
  %s8 = scalar_select 0, %s7, %s5
  $region1: #{tpu_custom_call.1} parent=0
    #allocation2 [shape = 'u8[8192]{0}', space=vmem, size = 0x2000, scoped, tag = 'input window, operand 1, single buffered']
    #allocation3 [shape = 's32[1]{0}', space=sflag, size = 0x4, scoped, tag = 'scoped memory for tpu_custom_call.1']
    #allocation4 [shape = 's32[1]{0}', space=sflag, size = 0x4, scoped, tag = 'scoped memory for tpu_custom_call.1']
    #allocation5 [shape = 'u8[8192]{0}', space=vmem, size = 0x2000, scoped, tag = 'output window, operand 0, single buffered']
    %9 = vsyncpa [#allocation3], 0
    %10 = vsyncpa [#allocation4], 0
    // Predicated region
    $region2: #{tpu_custom_call.1} parent=1 // pred_check
      _
    $region3: #{tpu_custom_call.1} parent=1 // pred_check_branch
      %12 = sbr.rel (0) target = $region5
    $region4: #{tpu_custom_call.1} parent=1 // pred_region
      _
    $region5: #{tpu_custom_call.1} parent=1 // pred_fallthru
      _
    // Predicated region
    $region6: #{tpu_custom_call.1} parent=1 // pred_check
      _
    $region7: #{tpu_custom_call.1} parent=1 // pred_check_branch
      %14 = sbr.rel (0) target = $region9
    $region8: #{tpu_custom_call.1} parent=1 // pred_region
      %s16 = ssub.s32 256, 256
      %17 = vsyncadd [#allocation3], %s16
      %s18 = sshll.u32 [#allocation2], 4
      %s19 = int_to_ptr.vmem [resolvable:$true] %s18
      %24 = dma.hbm_to_vmem [thread:$0]  %s1, 256, %s19, [#allocation3], 128, 128, 8
    $region9: #{tpu_custom_call.1} parent=1 // pred_fallthru
      _
    // Predicated region
    $region10: #{tpu_custom_call.1} parent=1 // pred_check
      _
    $region11: #{tpu_custom_call.1} parent=1 // pred_check_branch
      %26 = sbr.rel (0) target = $region13
    $region12: #{tpu_custom_call.1} parent=1 // pred_region
      _
    $region13: #{tpu_custom_call.1} parent=1 // pred_fallthru
      _
    // Predicated region
    $region14: #{tpu_custom_call.1} parent=1 // pred_check
      _
    $region15: #{tpu_custom_call.1} parent=1 // pred_check_branch
      %28 = sbr.rel (0) target = $region17
    $region16: #{tpu_custom_call.1} parent=1 // pred_region
      _
    $region17: #{tpu_custom_call.1} parent=1 // pred_fallthru
      _
    // Predicated region
    $region18: #{tpu_custom_call.1} parent=1 // pred_check
      _
    $region19: #{tpu_custom_call.1} parent=1 // pred_check_branch
      %30 = sbr.rel (0) target = $region21
    $region20: #{tpu_custom_call.1} parent=1 // pred_region
      %31 = dma.done [#allocation3], 256
    $region21: #{tpu_custom_call.1} parent=1 // pred_fallthru
      _
    %v32 = vld [vmem:[%s0] sm:$0xff]
    %v33 = vld [vmem:[%s0 + $0x8] sm:$0xff]
    %v34 = vld [vmem:[#allocation2] sm:$0xff]
    %v35 = vld [vmem:[#allocation2 + $0x8] sm:$0xff]
    %v36 = vld [vmem:[%s2] sm:$0x1]
    %v37 = vld [vmem:[%s3] sm:$0x1]
    %v38 = vadd.f32 %v32, %v34
    %v39 = vadd.f32 %v33, %v35
    %vm40 = vcmask 261120
    %v41 = vsel %vm40, %v38, 0.0
    %42 = vadd.xlane.f32.xlu0 %v41
    %v43 = vpop.xlane.xlu0 %42
    %v44 = vsel %vm40, %v39, 0.0
    %45 = vadd.xlane.f32.xlu0 %v44
    %v46 = vpop.xlane.xlu0 %45
    %v47 = vrcp.pop 32.0
    %v48 = vmul.f32 %v43, %v47
    %v49 = vmul.f32 %v46, %v47
    %v50 = vsub.f32 %v38, %v48
    %v51 = vsub.f32 %v39, %v49
    %v52 = vmul.f32 %v50, %v50
    %v53 = vmul.f32 %v51, %v51
    %v54 = vsel %vm40, %v52, 0.0
    %55 = vadd.xlane.f32.xlu0 %v54
    %v56 = vpop.xlane.xlu0 %55
    %v57 = vsel %vm40, %v53, 0.0
    %58 = vadd.xlane.f32.xlu0 %v57
    %v59 = vpop.xlane.xlu0 %58
    %v60 = vmul.f32 %v56, %v47
    %v61 = vmul.f32 %v59, %v47
    %v62 = vadd.f32 %v60, 1e-06
    %v63 = vadd.f32 %v61, 1e-06
    %v64 = vrsqrt.pop %v62
    %v65 = vrsqrt.pop %v63
    %v66 = vmul.f32 %v50, %v64
    %v67 = vmul.f32 %v51, %v65
    %v69 = vlaneseq
    %v70 = vshrl.u32 %v69, 7
    %v71 = vsub.s32 0, %v70
    %v72 = vrot.slane %v36, %v71
    %v74 = vmul.f32 %v66, %v72
    %v75 = vmul.f32 %v67, %v72
    %v77 = vlaneseq
    %v78 = vshrl.u32 %v77, 7
    %v79 = vsub.s32 0, %v78
    %v80 = vrot.slane %v37, %v79
    %v82 = vadd.f32 %v74, %v80
    %v83 = vadd.f32 %v75, %v80
    %84 = vst.msk [vmem:[#allocation5] sm:$0xff] %vm40, %v82
    %85 = vst.msk [vmem:[#allocation5 + $0x8] sm:$0xff] %vm40, %v83
    // Predicated region
    $region22: #{tpu_custom_call.1} parent=1 // pred_check
      _
    $region23: #{tpu_custom_call.1} parent=1 // pred_check_branch
      %87 = sbr.rel (0) target = $region25
    $region24: #{tpu_custom_call.1} parent=1 // pred_region
      %s89 = ssub.s32 256, 256
      %90 = vsyncadd [#allocation4], %s89
      %s91 = sshll.u32 [#allocation5], 4
      %s92 = int_to_ptr.vmem [resolvable:$true] %s91
      %97 = dma.vmem_to_hbm [thread:$0]  %s92, 256, %s4, [#allocation4], 128, 128, 8
    $region25: #{tpu_custom_call.1} parent=1 // pred_fallthru
      _
    // Predicated region
    $region26: #{tpu_custom_call.1} parent=1 // pred_check
      _
    $region27: #{tpu_custom_call.1} parent=1 // pred_check_branch
      %99 = sbr.rel (0) target = $region29
    $region28: #{tpu_custom_call.1} parent=1 // pred_region
      %100 = dma.done [#allocation4], 256
    $region29: #{tpu_custom_call.1} parent=1 // pred_fallthru
      _
    %101 = vsyncpa [#allocation3], 1
    %102 = vsyncpa [#allocation4], 1

</llo_original>
